<compile_context>
chip_gen: v7x
topology: tpu7x:2x2x1
jax: 0.10.0
libtpu: 0.0.40
codegen_flags: <defaults>
</compile_context>

<pallas_src>
import numpy as np
import jax
import jax.numpy as jnp
from jax.experimental import pallas as pl
from jax.experimental.pallas import tpu as pltpu

C_IN, C_OUT, GROUPS = 8, 16, 8
OCPG = C_OUT // GROUPS          # out channels per group
KH, KW = 1, 6
STRIDE_H, STRIDE_W = 16, 2
PAD_H, PAD_W = 0, 1

N, H_IN, W_IN = 2, 4, 8
H_OUT = (H_IN - 1) * STRIDE_H - 2 * PAD_H + (KH - 1) + 1   # 49
W_OUT = (W_IN - 1) * STRIDE_W - 2 * PAD_W + (KW - 1) + 1   # 18


def _deconv_sigmoid_kernel(lhs_ref, d_ref, s_ref, brow_ref, o_ref):
    # lhs_ref : (N*H_IN,  C_IN*W_IN)   input rows, group-blocked along lanes
    # d_ref   : (C_IN*W_IN, C_OUT*W_OUT) block scatter matrix (weights + width scatter + grouping)
    # s_ref   : (N*H_OUT, N*H_IN)      height scatter selection matrix (row h -> row h*stride_h)
    # brow_ref: (1, C_OUT*W_OUT)       bias broadcast row
    # o_ref   : (N*H_OUT, C_OUT*W_OUT) lane-dense output slab
    rows = jnp.dot(lhs_ref[...], d_ref[...], preferred_element_type=jnp.float32)   # (N*H_IN, C_OUT*W_OUT)
    full = jnp.dot(s_ref[...], rows, preferred_element_type=jnp.float32)           # (N*H_OUT, C_OUT*W_OUT)
    o_ref[...] = jax.nn.sigmoid(full + brow_ref[...])                              # one full unmasked store


def conv_transpose_sigmoid(x, weight, bias):
    # x: (N, C_IN, H_IN, W_IN); weight: (C_IN, OCPG, KH, KW); bias: (C_OUT,)
    wnp = np.asarray(weight)
    bnp = np.asarray(bias)

    # D2[c*W_IN + wi, co*W_OUT + wo] = W[c, oc, 0, kw] where co = c*OCPG + oc and
    # wo = wi*stride_w + kw - pad_w (padding-clipped taps dropped). Group g == input channel c.
    D2 = np.zeros((C_IN * W_IN, C_OUT * W_OUT), np.float32)
    for c in range(C_IN):
        for oc in range(OCPG):
            co = c * OCPG + oc
            for wi in range(W_IN):
                for kw in range(KW):
                    wo = wi * STRIDE_W + kw - PAD_W
                    if 0 <= wo < W_OUT:
                        D2[c * W_IN + wi, co * W_OUT + wo] = wnp[c, oc, 0, kw]
    D2 = jnp.asarray(D2)

    # Height scatter: output row n*H_OUT + h*stride_h <- input row n*H_IN + h (kH=1, pad_h=0).
    S2 = np.zeros((N * H_OUT, N * H_IN), np.float32)
    for n in range(N):
        for h in range(H_IN):
            S2[n * H_OUT + h * STRIDE_H, n * H_IN + h] = 1.0
    S2 = jnp.asarray(S2)

    # Bias broadcast row over the lane-dense (C_OUT*W_OUT) axis.
    brow = jnp.asarray(np.repeat(bnp.astype(np.float32), W_OUT).reshape(1, C_OUT * W_OUT))

    # LHS[n*H_IN + h, c*W_IN + w] = x[n, c, h, w]
    lhs = jnp.transpose(x, (0, 2, 1, 3)).reshape(N * H_IN, C_IN * W_IN)

    out2d = pl.pallas_call(
        _deconv_sigmoid_kernel,
        out_shape=jax.ShapeDtypeStruct((N * H_OUT, C_OUT * W_OUT), jnp.float32),
        grid=(1,),
        in_specs=[
            pl.BlockSpec((N * H_IN, C_IN * W_IN), lambda i: (0, 0)),
            pl.BlockSpec((C_IN * W_IN, C_OUT * W_OUT), lambda i: (0, 0)),
            pl.BlockSpec((N * H_OUT, N * H_IN), lambda i: (0, 0)),
            pl.BlockSpec((1, C_OUT * W_OUT), lambda i: (0, 0)),
        ],
        out_specs=pl.BlockSpec((N * H_OUT, C_OUT * W_OUT), lambda i: (0, 0)),
        compiler_params=pltpu.CompilerParams(dimension_semantics=("arbitrary",)),
    )(lhs, D2, S2, brow)

    # (N*H_OUT, C_OUT*W_OUT) -> NCHW
    out = out2d.reshape(N, H_OUT, C_OUT, W_OUT)
    return jnp.transpose(out, (0, 2, 1, 3))


def _reference(xnp, wnp, bnp):
    out = np.zeros((N, C_OUT, H_OUT, W_OUT), np.float32)
    for n in range(N):
        for g in range(GROUPS):
            for oc in range(OCPG):
                co = g * OCPG + oc
                for hi in range(H_IN):
                    ho = hi * STRIDE_H  # kH = 1, pad_h = 0
                    for wi in range(W_IN):
                        for kw in range(KW):
                            wo = wi * STRIDE_W + kw - PAD_W
                            if 0 <= wo < W_OUT:
                                out[n, co, ho, wo] += xnp[n, g, hi, wi] * wnp[g, oc, 0, kw]
    out = out + bnp[None, :, None, None]
    return 1.0 / (1.0 + np.exp(-out))


if __name__ == "__main__":
    key = jax.random.PRNGKey(0)
    kx, kw, kb = jax.random.split(key, 3)
    x = jax.random.normal(kx, (N, C_IN, H_IN, W_IN), dtype=jnp.float32)
    weight = jax.random.normal(kw, (C_IN, OCPG, KH, KW), dtype=jnp.float32) * 0.2
    bias = jax.random.normal(kb, (C_OUT,), dtype=jnp.float32) * 0.1

    y = conv_transpose_sigmoid(x, weight, bias)
    y = jax.block_until_ready(y)

    y_ref = _reference(np.asarray(x), np.asarray(weight), np.asarray(bias))
    assert y.shape == (N, C_OUT, H_OUT, W_OUT)
    np.testing.assert_allclose(np.asarray(y), y_ref, rtol=1e-5, atol=1e-5)
    print("KERNEL_OK")
</pallas_src>

<mosaic_0001>
module attributes {stable_mosaic.version = 11 : i64} {
  func.func @_deconv_sigmoid_kernel(%arg0: i32, %arg1: memref<8x64xf32, #tpu.memory_space<vmem>>, %arg2: memref<64x288xf32, #tpu.memory_space<vmem>>, %arg3: memref<98x8xf32, #tpu.memory_space<vmem>>, %arg4: memref<1x288xf32, #tpu.memory_space<vmem>>, %arg5: memref<98x288xf32, #tpu.memory_space<vmem>>) attributes {dimension_semantics = [#tpu.dimension_semantics<arbitrary>], iteration_bounds = array<i64: 1>, scalar_prefetch = 0 : i64, scratch_operands = 0 : i64, tpu.core_type = #tpu.core_type<tc>, window_params = [{pipeline_mode = #tpu.pipeline_mode<synchronous>, transform_indices = @transform_0, window_bounds = array<i64: 8, 64>}, {pipeline_mode = #tpu.pipeline_mode<synchronous>, transform_indices = @transform_1, window_bounds = array<i64: 64, 288>}, {pipeline_mode = #tpu.pipeline_mode<synchronous>, transform_indices = @transform_2, window_bounds = array<i64: 98, 8>}, {pipeline_mode = #tpu.pipeline_mode<synchronous>, transform_indices = @transform_3, window_bounds = array<i64: 1, 288>}, {pipeline_mode = #tpu.pipeline_mode<synchronous>, transform_indices = @transform_4, window_bounds = array<i64: 98, 288>}]} {
    %c0 = arith.constant 0 : index
    %c0_0 = arith.constant 0 : index
    %0 = vector.load %arg1[%c0, %c0_0] : memref<8x64xf32, #tpu.memory_space<vmem>>, vector<8x64xf32>
    %c0_1 = arith.constant 0 : index
    %c0_2 = arith.constant 0 : index
    %1 = vector.load %arg2[%c0_1, %c0_2] : memref<64x288xf32, #tpu.memory_space<vmem>>, vector<64x288xf32>
    %cst = arith.constant dense<0.000000e+00> : vector<8x288xf32>
    %2 = tpu.matmul %0, %1, %cst {dimension_numbers = #tpu.dot_dimension_numbers<[1], [0], [0], [1], [0, 0, 1, 1], [], []>} : vector<8x64xf32>, vector<64x288xf32>, vector<8x288xf32> -> vector<8x288xf32>
    %c0_3 = arith.constant 0 : index
    %c0_4 = arith.constant 0 : index
    %3 = vector.load %arg3[%c0_3, %c0_4] : memref<98x8xf32, #tpu.memory_space<vmem>>, vector<98x8xf32>
    %cst_5 = arith.constant dense<0.000000e+00> : vector<98x288xf32>
    %4 = tpu.matmul %3, %2, %cst_5 {dimension_numbers = #tpu.dot_dimension_numbers<[1], [0], [0], [1], [0, 0, 1, 1], [], []>} : vector<98x8xf32>, vector<8x288xf32>, vector<98x288xf32> -> vector<98x288xf32>
    %c0_6 = arith.constant 0 : index
    %c0_7 = arith.constant 0 : index
    %5 = vector.load %arg4[%c0_6, %c0_7] : memref<1x288xf32, #tpu.memory_space<vmem>>, vector<1x288xf32>
    %6 = vector.broadcast %5 : vector<1x288xf32> to vector<98x288xf32>
    %7 = arith.addf %4, %6 : vector<98x288xf32>
    %8 = arith.negf %7 : vector<98x288xf32>
    %9 = math.exp %8 : vector<98x288xf32>
    %cst_8 = arith.constant 1.000000e+00 : f32
    %10 = vector.broadcast %cst_8 : f32 to vector<98x288xf32>
    %11 = arith.addf %10, %9 : vector<98x288xf32>
    %12 = arith.divf %10, %11 : vector<98x288xf32>
    %c0_9 = arith.constant 0 : index
    %c0_10 = arith.constant 0 : index
    %13 = vector.load %arg5[%c0_9, %c0_10] : memref<98x288xf32, #tpu.memory_space<vmem>>, vector<98x288xf32>
    tpu.vector_store %arg5[%c0_9, %c0_10], %12 {strides = array<i32>} : memref<98x288xf32, #tpu.memory_space<vmem>>, vector<98x288xf32>,
    return
  }
  func.func @transform_0(%arg0: i32) -> (i32, i32) {
    %c0_i32 = arith.constant 0 : i32
    %c0_i32_0 = arith.constant 0 : i32
    %c0_i32_1 = arith.constant 0 : i32
    return %c0_i32, %c0_i32_0 : i32, i32
  }
  func.func @transform_1(%arg0: i32) -> (i32, i32) {
    %c0_i32 = arith.constant 0 : i32
    %c0_i32_0 = arith.constant 0 : i32
    %c0_i32_1 = arith.constant 0 : i32
    return %c0_i32, %c0_i32_0 : i32, i32
  }
  func.func @transform_2(%arg0: i32) -> (i32, i32) {
    %c0_i32 = arith.constant 0 : i32
    %c0_i32_0 = arith.constant 0 : i32
    %c0_i32_1 = arith.constant 0 : i32
    return %c0_i32, %c0_i32_0 : i32, i32
  }
  func.func @transform_3(%arg0: i32) -> (i32, i32) {
    %c0_i32 = arith.constant 0 : i32
    %c0_i32_0 = arith.constant 0 : i32
    %c0_i32_1 = arith.constant 0 : i32
    return %c0_i32, %c0_i32_0 : i32, i32
  }
  func.func @transform_4(%arg0: i32) -> (i32, i32) {
    %c0_i32 = arith.constant 0 : i32
    %c0_i32_0 = arith.constant 0 : i32
    %c0_i32_1 = arith.constant 0 : i32
    return %c0_i32, %c0_i32_0 : i32, i32
  }
}

</mosaic_0001>

<llo_original>
// kernel: tpu_custom_call.1
$region0: #{tpu_custom_call.1}
  #allocation0 [shape = 'u32[]', space=smem, size = 0x4, offset = 0x4, fixed_abs, tag = 'smem constant byte address 0x4 - core index']
  #allocation1 [shape = 'u32[144,128]{1,0:T(1,128)}', space=vmem, size = 0x12000, scoped, tag = 'internal scratch']
  %s0 = inlined_call_operand.vmem [shape: f32[8,64], index: 0, kind: input, shape index: {}]
  %s1 = inlined_call_operand.hbm [shape: f32[64,288], index: 1, kind: input, shape index: {}]
  %s2 = inlined_call_operand.vmem [shape: f32[98,8], index: 2, kind: input, shape index: {}]
  %s3 = inlined_call_operand.vmem [shape: f32[1,288], index: 3, kind: input, shape index: {}]
  %s4 = inlined_call_operand.vmem [shape: f32[98,288], index: 4, kind: output, shape index: {}]
  %s5 = sld [smem:[#allocation0]]
  $region30: #{tpu_custom_call.1} parent=0
    _
  %s7 = ssub.s32 1, %s5
  %s8 = scalar_select 0, %s7, %s5
  $region1: #{tpu_custom_call.1} parent=0
    #allocation2 [shape = 'u8[98304]{0}', space=vmem, size = 0x18000, scoped, tag = 'input window, operand 1, single buffered']
    #allocation3 [shape = 's32[1]{0}', space=sflag, size = 0x4, scoped, tag = 'scoped memory for tpu_custom_call.1']
    %9 = vsyncpa [#allocation3], 0
    // Predicated region
    $region2: #{tpu_custom_call.1} parent=1 // pred_check
      _
    $region3: #{tpu_custom_call.1} parent=1 // pred_check_branch
      %11 = sbr.rel (0) target = $region5
    $region4: #{tpu_custom_call.1} parent=1 // pred_region
      _
    $region5: #{tpu_custom_call.1} parent=1 // pred_fallthru
      _
    // Predicated region
    $region6: #{tpu_custom_call.1} parent=1 // pred_check
      _
    $region7: #{tpu_custom_call.1} parent=1 // pred_check_branch
      %13 = sbr.rel (0) target = $region9
    $region8: #{tpu_custom_call.1} parent=1 // pred_region
      %s15 = ssub.s32 3072, 3072
      %16 = vsyncadd [#allocation3], %s15
      %s17 = sshll.u32 [#allocation2], 4
      %s18 = int_to_ptr.vmem [resolvable:$true] %s17
      %23 = dma.hbm_to_vmem [thread:$0]  %s1, 3072, %s18, [#allocation3], 384, 384, 24
    $region9: #{tpu_custom_call.1} parent=1 // pred_fallthru
      _
    // Predicated region
    $region10: #{tpu_custom_call.1} parent=1 // pred_check
      _
    $region11: #{tpu_custom_call.1} parent=1 // pred_check_branch
      %25 = sbr.rel (0) target = $region13
    $region12: #{tpu_custom_call.1} parent=1 // pred_region
      _
    $region13: #{tpu_custom_call.1} parent=1 // pred_fallthru
      _
    // Predicated region
    $region14: #{tpu_custom_call.1} parent=1 // pred_check
      _
    $region15: #{tpu_custom_call.1} parent=1 // pred_check_branch
      %27 = sbr.rel (0) target = $region17
    $region16: #{tpu_custom_call.1} parent=1 // pred_region
      _
    $region17: #{tpu_custom_call.1} parent=1 // pred_fallthru
      _
    // Predicated region
    $region18: #{tpu_custom_call.1} parent=1 // pred_check
      _
    $region19: #{tpu_custom_call.1} parent=1 // pred_check_branch
      %29 = sbr.rel (0) target = $region21
    $region20: #{tpu_custom_call.1} parent=1 // pred_region
      %30 = dma.done [#allocation3], 3072
    $region21: #{tpu_custom_call.1} parent=1 // pred_fallthru
      _
    %v31 = vld [vmem:[%s0] sm:$0xff]
    %v32 = vld [vmem:[#allocation2] sm:$0xff]
    %v33 = vld [vmem:[#allocation2 + $0x8] sm:$0xff]
    %v34 = vld [vmem:[#allocation2 + $0x10] sm:$0xff]
    %v35 = vld [vmem:[#allocation2 + $0x18] sm:$0xff]
    %v36 = vld [vmem:[#allocation2 + $0x20] sm:$0xff]
    %v37 = vld [vmem:[#allocation2 + $0x28] sm:$0xff]
    %v38 = vld [vmem:[#allocation2 + $0x30] sm:$0xff]
    %v39 = vld [vmem:[#allocation2 + $0x38] sm:$0xff]
    %v40 = vld [vmem:[#allocation2 + $0x40] sm:$0xff]
    %v41 = vld [vmem:[#allocation2 + $0x48] sm:$0xff]
    %v42 = vld [vmem:[#allocation2 + $0x50] sm:$0xff]
    %v43 = vld [vmem:[#allocation2 + $0x58] sm:$0xff]
    %v44 = vld [vmem:[#allocation2 + $0x60] sm:$0xff]
    %v45 = vld [vmem:[#allocation2 + $0x68] sm:$0xff]
    %v46 = vld [vmem:[#allocation2 + $0x70] sm:$0xff]
    %v47 = vld [vmem:[#allocation2 + $0x78] sm:$0xff]
    %v48 = vld [vmem:[#allocation2 + $0x80] sm:$0xff]
    %v49 = vld [vmem:[#allocation2 + $0x88] sm:$0xff]
    %v50 = vld [vmem:[#allocation2 + $0x90] sm:$0xff]
    %v51 = vld [vmem:[#allocation2 + $0x98] sm:$0xff]
    %v52 = vld [vmem:[#allocation2 + $0xa0] sm:$0xff]
    %v53 = vld [vmem:[#allocation2 + $0xa8] sm:$0xff]
    %v54 = vld [vmem:[#allocation2 + $0xb0] sm:$0xff]
    %v55 = vld [vmem:[#allocation2 + $0xb8] sm:$0xff]
    %vm56 = vcmask 523264
    %v58 = vsel %vm56, %v31, 0
    %60 = vmatprep.subr.mxu0 %v33
    %61 = vmatpush1.msra.mxu0 %v32
    %62 = vmatprep.subr.mxu0 %v36
    %63 = vmatpush1.msra.mxu0 %v35
    %64 = vmatprep.subr.mxu0 %v39
    %65 = vmatpush1.msra.mxu0 %v38
    %66 = vmatprep.subr.mxu0 %v42
    %67 = vmatpush1.msra.mxu0 %v41
    %68 = vmatprep.subr.mxu0 %v45
    %69 = vmatpush1.msra.mxu0 %v44
    %70 = vmatprep.subr.mxu0 %v48
    %71 = vmatpush1.msra.mxu0 %v47
    %72 = vmatprep.subr.mxu0 %v51
    %73 = vmatpush1.msra.mxu0 %v50
    %74 = vmatprep.subr.mxu0 %v54
    %75 = vmatpush1.msra.mxu0 %v53
    %76 = vmatprep.subr.mxu0 0.0
    %77 = vmatpush1.msra.mxu0 0.0
    %78 = vmatprep.subr.mxu0 0.0
    %79 = vmatpush1.msra.mxu0 0.0
    %80 = vmatprep.subr.mxu0 0.0
    %81 = vmatpush1.msra.mxu0 0.0
    %82 = vmatprep.subr.mxu0 0.0
    %83 = vmatpush1.msra.mxu0 0.0
    %84 = vmatprep.subr.mxu0 0.0
    %85 = vmatpush1.msra.mxu0 0.0
    %86 = vmatprep.subr.mxu0 0.0
    %87 = vmatpush1.msra.mxu0 0.0
    %88 = vmatprep.subr.mxu0 0.0
    %89 = vmatpush1.msra.mxu0 0.0
    %90 = vmatprep.subr.mxu0 0.0
    %91 = vmatpush1.msra.mxu0 0.0
    %92 = vmatprep.subr.mxu0 0.0
    %93 = vmatpush1.msra.mxu0 0.0
    %94 = vmatprep.subr.mxu0 0.0
    %95 = vmatpush1.msra.mxu0 0.0
    %96 = vmatprep.subr.mxu0 0.0
    %97 = vmatpush1.msra.mxu0 0.0
    %98 = vmatprep.subr.mxu0 0.0
    %99 = vmatpush1.msra.mxu0 0.0
    %100 = vmatprep.subr.mxu0 0.0
    %101 = vmatpush1.msra.mxu0 0.0
    %102 = vmatprep.subr.mxu0 0.0
    %103 = vmatpush1.msra.mxu0 0.0
    %104 = vmatprep.subr.mxu0 0.0
    %105 = vmatpush1.msra.mxu0 0.0
    %106 = vmatprep.subr.mxu0 0.0
    %107 = vmatpush1.msra.mxu0 0.0
    %108 = vmatprep.subr.mxu0 0.0
    %109 = vmatpush1.msra.mxu0 0.0
    %110 = vmatprep.subr.mxu0 0.0
    %111 = vmatpush1.msra.mxu0 0.0
    %112 = vmatprep.subr.mxu0 0.0
    %113 = vmatpush1.msra.mxu0 0.0
    %114 = vmatprep.subr.mxu0 0.0
    %115 = vmatpush1.msra.mxu0 0.0
    %116 = vmatprep.subr.mxu0 0.0
    %117 = vmatpush1.msra.mxu0 0.0
    %118 = vmatprep.subr.mxu0 0.0
    %119 = vmatpush1.msra.mxu0 0.0
    %120 = vmatprep.subr.mxu0 0.0
    %121 = vmatpush1.msra.mxu0 0.0
    %122 = vmatprep.subr.mxu0 0.0
    %123 = vmatpush1.msra.mxu0 0.0
    %124 = vmatprep.mubr.f32.mxu0 0.0
    %125 = vmatmul.mubr.f32.gmra.mrb[0].mxu0 %v58
    %v126 = vpop.f32.mrb[0].mxu0
    %v127 = vadd.f32 0.0, %v126
    %v128 = vpop.f32.mrb[0].mxu0
    %v129 = vadd.f32 0.0, %v128
    %130 = vdwg.mxu0
    %131 = vmatprep.subr.mxu0 0.0
    %132 = vmatpush1.msra.mxu0 %v34
    %133 = vmatprep.subr.mxu0 0.0
    %134 = vmatpush1.msra.mxu0 %v37
    %135 = vmatprep.subr.mxu0 0.0
    %136 = vmatpush1.msra.mxu0 %v40
    %137 = vmatprep.subr.mxu0 0.0
    %138 = vmatpush1.msra.mxu0 %v43
    %139 = vmatprep.subr.mxu0 0.0
    %140 = vmatpush1.msra.mxu0 %v46
    %141 = vmatprep.subr.mxu0 0.0
    %142 = vmatpush1.msra.mxu0 %v49
    %143 = vmatprep.subr.mxu0 0.0
    %144 = vmatpush1.msra.mxu0 %v52
    %145 = vmatprep.subr.mxu0 0.0
    %146 = vmatpush1.msra.mxu0 %v55
    %147 = vmatprep.subr.mxu0 0.0
    %148 = vmatpush1.msra.mxu0 0.0
    %149 = vmatprep.subr.mxu0 0.0
    %150 = vmatpush1.msra.mxu0 0.0
    %151 = vmatprep.subr.mxu0 0.0
    %152 = vmatpush1.msra.mxu0 0.0
    %153 = vmatprep.subr.mxu0 0.0
    %154 = vmatpush1.msra.mxu0 0.0
    %155 = vmatprep.subr.mxu0 0.0
    %156 = vmatpush1.msra.mxu0 0.0
    %157 = vmatprep.subr.mxu0 0.0
    %158 = vmatpush1.msra.mxu0 0.0
    %159 = vmatprep.subr.mxu0 0.0
    %160 = vmatpush1.msra.mxu0 0.0
    %161 = vmatprep.subr.mxu0 0.0
    %162 = vmatpush1.msra.mxu0 0.0
    %163 = vmatprep.subr.mxu0 0.0
    %164 = vmatpush1.msra.mxu0 0.0
    %165 = vmatprep.subr.mxu0 0.0
    %166 = vmatpush1.msra.mxu0 0.0
    %167 = vmatprep.subr.mxu0 0.0
    %168 = vmatpush1.msra.mxu0 0.0
    %169 = vmatprep.subr.mxu0 0.0
    %170 = vmatpush1.msra.mxu0 0.0
    %171 = vmatprep.subr.mxu0 0.0
    %172 = vmatpush1.msra.mxu0 0.0
    %173 = vmatprep.subr.mxu0 0.0
    %174 = vmatpush1.msra.mxu0 0.0
    %175 = vmatprep.subr.mxu0 0.0
    %176 = vmatpush1.msra.mxu0 0.0
    %177 = vmatprep.subr.mxu0 0.0
    %178 = vmatpush1.msra.mxu0 0.0
    %179 = vmatprep.subr.mxu0 0.0
    %180 = vmatpush1.msra.mxu0 0.0
    %181 = vmatprep.subr.mxu0 0.0
    %182 = vmatpush1.msra.mxu0 0.0
    %183 = vmatprep.subr.mxu0 0.0
    %184 = vmatpush1.msra.mxu0 0.0
    %185 = vmatprep.subr.mxu0 0.0
    %186 = vmatpush1.msra.mxu0 0.0
    %187 = vmatprep.subr.mxu0 0.0
    %188 = vmatpush1.msra.mxu0 0.0
    %189 = vmatprep.subr.mxu0 0.0
    %190 = vmatpush1.msra.mxu0 0.0
    %191 = vmatprep.subr.mxu0 0.0
    %192 = vmatpush1.msra.mxu0 0.0
    %193 = vmatprep.subr.mxu0 0.0
    %194 = vmatpush1.msra.mxu0 0.0
    %195 = vmatprep.mubr.f32.mxu0 0.0
    %196 = vmatmul.mubr.f32.gmra.mrb[0].mxu0 %v58
    %v197 = vpop.f32.mrb[0].mxu0
    %v198 = vadd.f32 0.0, %v197
    %v199 = vpop.f32.mrb[0].mxu0
    %200 = vdwg.mxu0
    %v201 = vld [vmem:[%s2] sm:$0xff]
    %v202 = vld [vmem:[%s2 + $0x8] sm:$0xff]
    %v203 = vld [vmem:[%s2 + $0x10] sm:$0xff]
    %v204 = vld [vmem:[%s2 + $0x18] sm:$0xff]
    %v205 = vld [vmem:[%s2 + $0x20] sm:$0xff]
    %v206 = vld [vmem:[%s2 + $0x28] sm:$0xff]
    %v207 = vld [vmem:[%s2 + $0x30] sm:$0xff]
    %v208 = vld [vmem:[%s2 + $0x38] sm:$0xff]
    %v209 = vld [vmem:[%s2 + $0x40] sm:$0xff]
    %v210 = vld [vmem:[%s2 + $0x48] sm:$0xff]
    %v211 = vld [vmem:[%s2 + $0x50] sm:$0xff]
    %v212 = vld [vmem:[%s2 + $0x58] sm:$0xff]
    %v213 = vld [vmem:[%s2 + $0x60] sm:$0x3]
    %v214 = vld [vmem:[%s3] sm:$0x7]
    %v216 = vlaneseq
    %v217 = vshrl.u32 %v216, 7
    %v218 = vsub.s32 0, %v217
    %v219 = vrot.slane %v214, %v218
    %v220 = vlaneseq
    %v221 = vshrl.u32 %v220, 7
    %v222 = vsub.s32 1, %v221
    %v223 = vrot.slane %v214, %v222
    %v224 = vlaneseq
    %v225 = vshrl.u32 %v224, 7
    %v226 = vsub.s32 2, %v225
    %v227 = vrot.slane %v214, %v226
    %vm231 = vcmask 64512
    %v233 = vsel %vm231, %v201, 0
    %v236 = vsel %vm231, %v202, 0
    %v239 = vsel %vm231, %v203, 0
    %v242 = vsel %vm231, %v204, 0
    %v245 = vsel %vm231, %v205, 0
    %v248 = vsel %vm231, %v206, 0
    %v251 = vsel %vm231, %v207, 0
    %v254 = vsel %vm231, %v208, 0
    %v257 = vsel %vm231, %v209, 0
    %v260 = vsel %vm231, %v210, 0
    %v263 = vsel %vm231, %v211, 0
    %v266 = vsel %vm231, %v212, 0
    %v269 = vsel %vm231, %v213, 0
    %271 = vmatprep.subr.mxu0 %v129
    %272 = vmatpush1.msra.mxu0 %v127
    %273 = vmatprep.subr.mxu0 0.0
    %274 = vmatpush1.msra.mxu0 0.0
    %275 = vmatprep.subr.mxu0 0.0
    %276 = vmatpush1.msra.mxu0 0.0
    %277 = vmatprep.subr.mxu0 0.0
    %278 = vmatpush1.msra.mxu0 0.0
    %279 = vmatprep.subr.mxu0 0.0
    %280 = vmatpush1.msra.mxu0 0.0
    %281 = vmatprep.subr.mxu0 0.0
    %282 = vmatpush1.msra.mxu0 0.0
    %283 = vmatprep.subr.mxu0 0.0
    %284 = vmatpush1.msra.mxu0 0.0
    %285 = vmatprep.subr.mxu0 0.0
    %286 = vmatpush1.msra.mxu0 0.0
    %287 = vmatprep.subr.mxu0 0.0
    %288 = vmatpush1.msra.mxu0 0.0
    %289 = vmatprep.subr.mxu0 0.0
    %290 = vmatpush1.msra.mxu0 0.0
    %291 = vmatprep.subr.mxu0 0.0
    %292 = vmatpush1.msra.mxu0 0.0
    %293 = vmatprep.subr.mxu0 0.0
    %294 = vmatpush1.msra.mxu0 0.0
    %295 = vmatprep.subr.mxu0 0.0
    %296 = vmatpush1.msra.mxu0 0.0
    %297 = vmatprep.subr.mxu0 0.0
    %298 = vmatpush1.msra.mxu0 0.0
    %299 = vmatprep.subr.mxu0 0.0
    %300 = vmatpush1.msra.mxu0 0.0
    %301 = vmatprep.subr.mxu0 0.0
    %302 = vmatpush1.msra.mxu0 0.0
    %303 = vmatprep.subr.mxu0 0.0
    %304 = vmatpush1.msra.mxu0 0.0
    %305 = vmatprep.subr.mxu0 0.0
    %306 = vmatpush1.msra.mxu0 0.0
    %307 = vmatprep.subr.mxu0 0.0
    %308 = vmatpush1.msra.mxu0 0.0
    %309 = vmatprep.subr.mxu0 0.0
    %310 = vmatpush1.msra.mxu0 0.0
    %311 = vmatprep.subr.mxu0 0.0
    %312 = vmatpush1.msra.mxu0 0.0
    %313 = vmatprep.subr.mxu0 0.0
    %314 = vmatpush1.msra.mxu0 0.0
    %315 = vmatprep.subr.mxu0 0.0
    %316 = vmatpush1.msra.mxu0 0.0
    %317 = vmatprep.subr.mxu0 0.0
    %318 = vmatpush1.msra.mxu0 0.0
    %319 = vmatprep.subr.mxu0 0.0
    %320 = vmatpush1.msra.mxu0 0.0
    %321 = vmatprep.subr.mxu0 0.0
    %322 = vmatpush1.msra.mxu0 0.0
    %323 = vmatprep.subr.mxu0 0.0
    %324 = vmatpush1.msra.mxu0 0.0
    %325 = vmatprep.subr.mxu0 0.0
    %326 = vmatpush1.msra.mxu0 0.0
    %327 = vmatprep.subr.mxu0 0.0
    %328 = vmatpush1.msra.mxu0 0.0
    %329 = vmatprep.subr.mxu0 0.0
    %330 = vmatpush1.msra.mxu0 0.0
    %331 = vmatprep.subr.mxu0 0.0
    %332 = vmatpush1.msra.mxu0 0.0
    %333 = vmatprep.subr.mxu0 0.0
    %334 = vmatpush1.msra.mxu0 0.0
    %335 = vmatprep.mubr.f32.mxu0 0.0
    %336 = vmatmul.mubr.f32.gmra.mrb[0].mxu0 %v233
    %v337 = vpop.f32.mrb[0].mxu0
    %v338 = vadd.f32 %v219, %v337
    %v339 = vpop.f32.mrb[0].mxu0
    %v340 = vadd.f32 %v223, %v339
    %341 = vmatprep.mubr.f32.mxu0 0.0
    %342 = vmatmul.mubr.f32.gmra.mrb[0].mxu0 %v236
    %v343 = vpop.f32.mrb[0].mxu0
    %v344 = vadd.f32 %v219, %v343
    %v345 = vpop.f32.mrb[0].mxu0
    %v346 = vadd.f32 %v223, %v345
    %347 = vmatprep.mubr.f32.mxu0 0.0
    %348 = vmatmul.mubr.f32.gmra.mrb[0].mxu0 %v239
    %v349 = vpop.f32.mrb[0].mxu0
    %v350 = vadd.f32 %v219, %v349
    %v351 = vpop.f32.mrb[0].mxu0
    %v352 = vadd.f32 %v223, %v351
    %353 = vmatprep.mubr.f32.mxu0 0.0
    %354 = vmatmul.mubr.f32.gmra.mrb[0].mxu0 %v242
    %v355 = vpop.f32.mrb[0].mxu0
    %v356 = vadd.f32 %v219, %v355
    %v357 = vpop.f32.mrb[0].mxu0
    %v358 = vadd.f32 %v223, %v357
    %359 = vmatprep.mubr.f32.mxu0 0.0
    %360 = vmatmul.mubr.f32.gmra.mrb[0].mxu0 %v245
    %v361 = vpop.f32.mrb[0].mxu0
    %v362 = vadd.f32 %v219, %v361
    %v363 = vpop.f32.mrb[0].mxu0
    %v364 = vadd.f32 %v223, %v363
    %365 = vmatprep.mubr.f32.mxu0 0.0
    %366 = vmatmul.mubr.f32.gmra.mrb[0].mxu0 %v248
    %v367 = vpop.f32.mrb[0].mxu0
    %v368 = vadd.f32 %v219, %v367
    %v369 = vpop.f32.mrb[0].mxu0
    %v370 = vadd.f32 %v223, %v369
    %371 = vmatprep.mubr.f32.mxu0 0.0
    %372 = vmatmul.mubr.f32.gmra.mrb[0].mxu0 %v251
    %v373 = vpop.f32.mrb[0].mxu0
    %v374 = vadd.f32 %v219, %v373
    %v375 = vpop.f32.mrb[0].mxu0
    %v376 = vadd.f32 %v223, %v375
    %377 = vmatprep.mubr.f32.mxu0 0.0
    %378 = vmatmul.mubr.f32.gmra.mrb[0].mxu0 %v254
    %v379 = vpop.f32.mrb[0].mxu0
    %v380 = vadd.f32 %v219, %v379
    %v381 = vpop.f32.mrb[0].mxu0
    %v382 = vadd.f32 %v223, %v381
    %383 = vmatprep.mubr.f32.mxu0 0.0
    %384 = vmatmul.mubr.f32.gmra.mrb[0].mxu0 %v257
    %v385 = vpop.f32.mrb[0].mxu0
    %v386 = vadd.f32 %v219, %v385
    %v387 = vpop.f32.mrb[0].mxu0
    %v388 = vadd.f32 %v223, %v387
    %389 = vmatprep.mubr.f32.mxu0 0.0
    %390 = vmatmul.mubr.f32.gmra.mrb[0].mxu0 %v260
    %v391 = vpop.f32.mrb[0].mxu0
    %v392 = vadd.f32 %v219, %v391
    %v393 = vpop.f32.mrb[0].mxu0
    %v394 = vadd.f32 %v223, %v393
    %395 = vmatprep.mubr.f32.mxu0 0.0
    %396 = vmatmul.mubr.f32.gmra.mrb[0].mxu0 %v263
    %v397 = vpop.f32.mrb[0].mxu0
    %v398 = vadd.f32 %v219, %v397
    %v399 = vpop.f32.mrb[0].mxu0
    %v400 = vadd.f32 %v223, %v399
    %401 = vmatprep.mubr.f32.mxu0 0.0
    %402 = vmatmul.mubr.f32.gmra.mrb[0].mxu0 %v266
    %v403 = vpop.f32.mrb[0].mxu0
    %v404 = vadd.f32 %v219, %v403
    %v405 = vpop.f32.mrb[0].mxu0
    %v406 = vadd.f32 %v223, %v405
    %407 = vmatprep.mubr.f32.mxu0 0.0
    %408 = vmatmul.mubr.f32.gmra.mrb[0].mxu0 %v269
    %v409 = vpop.f32.mrb[0].mxu0
    %v410 = vadd.f32 %v219, %v409
    %v411 = vpop.f32.mrb[0].mxu0
    %v412 = vadd.f32 %v223, %v411
    %413 = vdwg.mxu0
    %414 = vmatprep.subr.mxu0 0.0
    %415 = vmatpush1.msra.mxu0 %v198
    %416 = vmatprep.subr.mxu0 0.0
    %417 = vmatpush1.msra.mxu0 0.0
    %418 = vmatprep.subr.mxu0 0.0
    %419 = vmatpush1.msra.mxu0 0.0
    %420 = vmatprep.subr.mxu0 0.0
    %421 = vmatpush1.msra.mxu0 0.0
    %422 = vmatprep.subr.mxu0 0.0
    %423 = vmatpush1.msra.mxu0 0.0
    %424 = vmatprep.subr.mxu0 0.0
    %425 = vmatpush1.msra.mxu0 0.0
    %426 = vmatprep.subr.mxu0 0.0
    %427 = vmatpush1.msra.mxu0 0.0
    %428 = vmatprep.subr.mxu0 0.0
    %429 = vmatpush1.msra.mxu0 0.0
    %430 = vmatprep.subr.mxu0 0.0
    %431 = vmatpush1.msra.mxu0 0.0
    %432 = vmatprep.subr.mxu0 0.0
    %433 = vmatpush1.msra.mxu0 0.0
    %434 = vmatprep.subr.mxu0 0.0
    %435 = vmatpush1.msra.mxu0 0.0
    %436 = vmatprep.subr.mxu0 0.0
    %437 = vmatpush1.msra.mxu0 0.0
    %438 = vmatprep.subr.mxu0 0.0
    %439 = vmatpush1.msra.mxu0 0.0
    %440 = vmatprep.subr.mxu0 0.0
    %441 = vmatpush1.msra.mxu0 0.0
    %442 = vmatprep.subr.mxu0 0.0
    %443 = vmatpush1.msra.mxu0 0.0
    %444 = vmatprep.subr.mxu0 0.0
    %445 = vmatpush1.msra.mxu0 0.0
    %446 = vmatprep.subr.mxu0 0.0
    %447 = vmatpush1.msra.mxu0 0.0
    %448 = vmatprep.subr.mxu0 0.0
    %449 = vmatpush1.msra.mxu0 0.0
    %450 = vmatprep.subr.mxu0 0.0
    %451 = vmatpush1.msra.mxu0 0.0
    %452 = vmatprep.subr.mxu0 0.0
    %453 = vmatpush1.msra.mxu0 0.0
    %454 = vmatprep.subr.mxu0 0.0
    %455 = vmatpush1.msra.mxu0 0.0
    %456 = vmatprep.subr.mxu0 0.0
    %457 = vmatpush1.msra.mxu0 0.0
    %458 = vmatprep.subr.mxu0 0.0
    %459 = vmatpush1.msra.mxu0 0.0
    %460 = vmatprep.subr.mxu0 0.0
    %461 = vmatpush1.msra.mxu0 0.0
    %462 = vmatprep.subr.mxu0 0.0
    %463 = vmatpush1.msra.mxu0 0.0
    %464 = vmatprep.subr.mxu0 0.0
    %465 = vmatpush1.msra.mxu0 0.0
    %466 = vmatprep.subr.mxu0 0.0
    %467 = vmatpush1.msra.mxu0 0.0
    %468 = vmatprep.subr.mxu0 0.0
    %469 = vmatpush1.msra.mxu0 0.0
    %470 = vmatprep.subr.mxu0 0.0
    %471 = vmatpush1.msra.mxu0 0.0
    %472 = vmatprep.subr.mxu0 0.0
    %473 = vmatpush1.msra.mxu0 0.0
    %474 = vmatprep.subr.mxu0 0.0
    %475 = vmatpush1.msra.mxu0 0.0
    %476 = vmatprep.subr.mxu0 0.0
    %477 = vmatpush1.msra.mxu0 0.0
    %478 = vmatprep.mubr.f32.mxu0 0.0
    %479 = vmatmul.mubr.f32.gmra.mrb[0].mxu0 %v233
    %v480 = vpop.f32.mrb[0].mxu0
    %v481 = vadd.f32 %v227, %v480
    %v482 = vpop.f32.mrb[0].mxu0
    %483 = vmatprep.mubr.f32.mxu0 0.0
    %484 = vmatmul.mubr.f32.gmra.mrb[0].mxu0 %v236
    %v485 = vpop.f32.mrb[0].mxu0
    %v486 = vadd.f32 %v227, %v485
    %v487 = vpop.f32.mrb[0].mxu0
    %488 = vmatprep.mubr.f32.mxu0 0.0
    %489 = vmatmul.mubr.f32.gmra.mrb[0].mxu0 %v239
    %v490 = vpop.f32.mrb[0].mxu0
    %v491 = vadd.f32 %v227, %v490
    %v492 = vpop.f32.mrb[0].mxu0
    %493 = vmatprep.mubr.f32.mxu0 0.0
    %494 = vmatmul.mubr.f32.gmra.mrb[0].mxu0 %v242
    %v495 = vpop.f32.mrb[0].mxu0
    %v496 = vadd.f32 %v227, %v495
    %v497 = vpop.f32.mrb[0].mxu0
    %498 = vmatprep.mubr.f32.mxu0 0.0
    %499 = vmatmul.mubr.f32.gmra.mrb[0].mxu0 %v245
    %v500 = vpop.f32.mrb[0].mxu0
    %v501 = vadd.f32 %v227, %v500
    %v502 = vpop.f32.mrb[0].mxu0
    %503 = vmatprep.mubr.f32.mxu0 0.0
    %504 = vmatmul.mubr.f32.gmra.mrb[0].mxu0 %v248
    %v505 = vpop.f32.mrb[0].mxu0
    %v506 = vadd.f32 %v227, %v505
    %v507 = vpop.f32.mrb[0].mxu0
    %508 = vmatprep.mubr.f32.mxu0 0.0
    %509 = vmatmul.mubr.f32.gmra.mrb[0].mxu0 %v251
    %v510 = vpop.f32.mrb[0].mxu0
    %v511 = vadd.f32 %v227, %v510
    %v512 = vpop.f32.mrb[0].mxu0
    %513 = vmatprep.mubr.f32.mxu0 0.0
    %514 = vmatmul.mubr.f32.gmra.mrb[0].mxu0 %v254
    %v515 = vpop.f32.mrb[0].mxu0
    %v516 = vadd.f32 %v227, %v515
    %v517 = vpop.f32.mrb[0].mxu0
    %518 = vmatprep.mubr.f32.mxu0 0.0
    %519 = vmatmul.mubr.f32.gmra.mrb[0].mxu0 %v257
    %v520 = vpop.f32.mrb[0].mxu0
    %v521 = vadd.f32 %v227, %v520
    %v522 = vpop.f32.mrb[0].mxu0
    %523 = vmatprep.mubr.f32.mxu0 0.0
    %524 = vmatmul.mubr.f32.gmra.mrb[0].mxu0 %v260
    %v525 = vpop.f32.mrb[0].mxu0
    %v526 = vadd.f32 %v227, %v525
    %v527 = vpop.f32.mrb[0].mxu0
    %528 = vmatprep.mubr.f32.mxu0 0.0
    %529 = vmatmul.mubr.f32.gmra.mrb[0].mxu0 %v263
    %v530 = vpop.f32.mrb[0].mxu0
    %v531 = vadd.f32 %v227, %v530
    %v532 = vpop.f32.mrb[0].mxu0
    %533 = vmatprep.mubr.f32.mxu0 0.0
    %534 = vmatmul.mubr.f32.gmra.mrb[0].mxu0 %v266
    %v535 = vpop.f32.mrb[0].mxu0
    %v536 = vadd.f32 %v227, %v535
    %v537 = vpop.f32.mrb[0].mxu0
    %538 = vmatprep.mubr.f32.mxu0 0.0
    %539 = vmatmul.mubr.f32.gmra.mrb[0].mxu0 %v269
    %v540 = vpop.f32.mrb[0].mxu0
    %v541 = vadd.f32 %v227, %v540
    %v542 = vpop.f32.mrb[0].mxu0
    %543 = vdwg.mxu0
    %v544 = vxor.u32 %v338, 2147483648
    %v545 = vxor.u32 %v340, 2147483648
    %v546 = vxor.u32 %v481, 2147483648
    %v547 = vxor.u32 %v344, 2147483648
    %v548 = vxor.u32 %v346, 2147483648
    %v549 = vxor.u32 %v486, 2147483648
    %v550 = vxor.u32 %v350, 2147483648
    %v551 = vxor.u32 %v352, 2147483648
    %v552 = vxor.u32 %v491, 2147483648
    %v553 = vxor.u32 %v356, 2147483648
    %v554 = vxor.u32 %v358, 2147483648
    %v555 = vxor.u32 %v496, 2147483648
    %v556 = vxor.u32 %v362, 2147483648
    %v557 = vxor.u32 %v364, 2147483648
    %v558 = vxor.u32 %v501, 2147483648
    %v559 = vxor.u32 %v368, 2147483648
    %v560 = vxor.u32 %v370, 2147483648
    %v561 = vxor.u32 %v506, 2147483648
    %v562 = vxor.u32 %v374, 2147483648
    %v563 = vxor.u32 %v376, 2147483648
    %v564 = vxor.u32 %v511, 2147483648
    %v565 = vxor.u32 %v380, 2147483648
    %v566 = vxor.u32 %v382, 2147483648
    %v567 = vxor.u32 %v516, 2147483648
    %v568 = vxor.u32 %v386, 2147483648
    %v569 = vxor.u32 %v388, 2147483648
    %v570 = vxor.u32 %v521, 2147483648
    %v571 = vxor.u32 %v392, 2147483648
    %v572 = vxor.u32 %v394, 2147483648
    %v573 = vxor.u32 %v526, 2147483648
    %v574 = vxor.u32 %v398, 2147483648
    %v575 = vxor.u32 %v400, 2147483648
    %v576 = vxor.u32 %v531, 2147483648
    %v577 = vxor.u32 %v404, 2147483648
    %v578 = vxor.u32 %v406, 2147483648
    %v579 = vxor.u32 %v536, 2147483648
    %v580 = vxor.u32 %v410, 2147483648
    %v581 = vxor.u32 %v412, 2147483648
    %v582 = vxor.u32 %v541, 2147483648
    %v583 = vmul.f32 %v544, 1.442695
    %v584 = vpow.pop %v583
    %v585 = vmul.f32 %v545, 1.442695
    %v586 = vpow.pop %v585
    %v587 = vmul.f32 %v546, 1.442695
    %v588 = vpow.pop %v587
    %v589 = vmul.f32 %v547, 1.442695
    %v590 = vpow.pop %v589
    %v591 = vmul.f32 %v548, 1.442695
    %v592 = vpow.pop %v591
    %v593 = vmul.f32 %v549, 1.442695
    %v594 = vpow.pop %v593
    %v595 = vmul.f32 %v550, 1.442695
    %v596 = vpow.pop %v595
    %v597 = vmul.f32 %v551, 1.442695
    %v598 = vpow.pop %v597
    %v599 = vmul.f32 %v552, 1.442695
    %v600 = vpow.pop %v599
    %v601 = vmul.f32 %v553, 1.442695
    %v602 = vpow.pop %v601
    %v603 = vmul.f32 %v554, 1.442695
    %v604 = vpow.pop %v603
    %v605 = vmul.f32 %v555, 1.442695
    %v606 = vpow.pop %v605
    %v607 = vmul.f32 %v556, 1.442695
    %v608 = vpow.pop %v607
    %v609 = vmul.f32 %v557, 1.442695
    %v610 = vpow.pop %v609
    %v611 = vmul.f32 %v558, 1.442695
    %v612 = vpow.pop %v611
    %v613 = vmul.f32 %v559, 1.442695
    %v614 = vpow.pop %v613
    %v615 = vmul.f32 %v560, 1.442695
    %v616 = vpow.pop %v615
    %v617 = vmul.f32 %v561, 1.442695
    %v618 = vpow.pop %v617
    %v619 = vmul.f32 %v562, 1.442695
    %v620 = vpow.pop %v619
    %v621 = vmul.f32 %v563, 1.442695
    %v622 = vpow.pop %v621
    %v623 = vmul.f32 %v564, 1.442695
    %v624 = vpow.pop %v623
    %v625 = vmul.f32 %v565, 1.442695
    %v626 = vpow.pop %v625
    %v627 = vmul.f32 %v566, 1.442695
    %v628 = vpow.pop %v627
    %v629 = vmul.f32 %v567, 1.442695
    %v630 = vpow.pop %v629
    %v631 = vmul.f32 %v568, 1.442695
    %v632 = vpow.pop %v631
    %v633 = vmul.f32 %v569, 1.442695
    %v634 = vpow.pop %v633
    %v635 = vmul.f32 %v570, 1.442695
    %v636 = vpow.pop %v635
    %v637 = vmul.f32 %v571, 1.442695
    %v638 = vpow.pop %v637
    %v639 = vmul.f32 %v572, 1.442695
    %v640 = vpow.pop %v639
    %v641 = vmul.f32 %v573, 1.442695
    %v642 = vpow.pop %v641
    %v643 = vmul.f32 %v574, 1.442695
    %v644 = vpow.pop %v643
    %v645 = vmul.f32 %v575, 1.442695
    %v646 = vpow.pop %v645
    %v647 = vmul.f32 %v576, 1.442695
    %v648 = vpow.pop %v647
    %v649 = vmul.f32 %v577, 1.442695
    %v650 = vpow.pop %v649
    %v651 = vmul.f32 %v578, 1.442695
    %v652 = vpow.pop %v651
    %v653 = vmul.f32 %v579, 1.442695
    %v654 = vpow.pop %v653
    %v655 = vmul.f32 %v580, 1.442695
    %v656 = vpow.pop %v655
    %v657 = vmul.f32 %v581, 1.442695
    %v658 = vpow.pop %v657
    %v659 = vmul.f32 %v582, 1.442695
    %v660 = vpow.pop %v659
    %v661 = vadd.f32 %v584, 1.0
    %v662 = vadd.f32 %v586, 1.0
    %v663 = vadd.f32 %v588, 1.0
    %v664 = vadd.f32 %v590, 1.0
    %v665 = vadd.f32 %v592, 1.0
    %v666 = vadd.f32 %v594, 1.0
    %v667 = vadd.f32 %v596, 1.0
    %v668 = vadd.f32 %v598, 1.0
    %v669 = vadd.f32 %v600, 1.0
    %v670 = vadd.f32 %v602, 1.0
    %v671 = vadd.f32 %v604, 1.0
    %v672 = vadd.f32 %v606, 1.0
    %v673 = vadd.f32 %v608, 1.0
    %v674 = vadd.f32 %v610, 1.0
    %v675 = vadd.f32 %v612, 1.0
    %v676 = vadd.f32 %v614, 1.0
    %v677 = vadd.f32 %v616, 1.0
    %v678 = vadd.f32 %v618, 1.0
    %v679 = vadd.f32 %v620, 1.0
    %v680 = vadd.f32 %v622, 1.0
    %v681 = vadd.f32 %v624, 1.0
    %v682 = vadd.f32 %v626, 1.0
    %v683 = vadd.f32 %v628, 1.0
    %v684 = vadd.f32 %v630, 1.0
    %v685 = vadd.f32 %v632, 1.0
    %v686 = vadd.f32 %v634, 1.0
    %v687 = vadd.f32 %v636, 1.0
    %v688 = vadd.f32 %v638, 1.0
    %v689 = vadd.f32 %v640, 1.0
    %v690 = vadd.f32 %v642, 1.0
    %v691 = vadd.f32 %v644, 1.0
    %v692 = vadd.f32 %v646, 1.0
    %v693 = vadd.f32 %v648, 1.0
    %v694 = vadd.f32 %v650, 1.0
    %v695 = vadd.f32 %v652, 1.0
    %v696 = vadd.f32 %v654, 1.0
    %v697 = vadd.f32 %v656, 1.0
    %v698 = vadd.f32 %v658, 1.0
    %v699 = vadd.f32 %v660, 1.0
    %v700 = vrcp.pop %v661
    %v701 = vmul.f32 1.0, %v700
    %v702 = vrcp.pop %v662
    %v703 = vmul.f32 1.0, %v702
    %v704 = vrcp.pop %v663
    %v705 = vmul.f32 1.0, %v704
    %v706 = vrcp.pop %v664
    %v707 = vmul.f32 1.0, %v706
    %v708 = vrcp.pop %v665
    %v709 = vmul.f32 1.0, %v708
    %v710 = vrcp.pop %v666
    %v711 = vmul.f32 1.0, %v710
    %v712 = vrcp.pop %v667
    %v713 = vmul.f32 1.0, %v712
    %v714 = vrcp.pop %v668
    %v715 = vmul.f32 1.0, %v714
    %v716 = vrcp.pop %v669
    %v717 = vmul.f32 1.0, %v716
    %v718 = vrcp.pop %v670
    %v719 = vmul.f32 1.0, %v718
    %v720 = vrcp.pop %v671
    %v721 = vmul.f32 1.0, %v720
    %v722 = vrcp.pop %v672
    %v723 = vmul.f32 1.0, %v722
    %v724 = vrcp.pop %v673
    %v725 = vmul.f32 1.0, %v724
    %v726 = vrcp.pop %v674
    %v727 = vmul.f32 1.0, %v726
    %v728 = vrcp.pop %v675
    %v729 = vmul.f32 1.0, %v728
    %v730 = vrcp.pop %v676
    %v731 = vmul.f32 1.0, %v730
    %v732 = vrcp.pop %v677
    %v733 = vmul.f32 1.0, %v732
    %v734 = vrcp.pop %v678
    %v735 = vmul.f32 1.0, %v734
    %v736 = vrcp.pop %v679
    %v737 = vmul.f32 1.0, %v736
    %v738 = vrcp.pop %v680
    %v739 = vmul.f32 1.0, %v738
    %v740 = vrcp.pop %v681
    %v741 = vmul.f32 1.0, %v740
    %v742 = vrcp.pop %v682
    %v743 = vmul.f32 1.0, %v742
    %v744 = vrcp.pop %v683
    %v745 = vmul.f32 1.0, %v744
    %v746 = vrcp.pop %v684
    %v747 = vmul.f32 1.0, %v746
    %v748 = vrcp.pop %v685
    %v749 = vmul.f32 1.0, %v748
    %v750 = vrcp.pop %v686
    %v751 = vmul.f32 1.0, %v750
    %v752 = vrcp.pop %v687
    %v753 = vmul.f32 1.0, %v752
    %v754 = vrcp.pop %v688
    %v755 = vmul.f32 1.0, %v754
    %v756 = vrcp.pop %v689
    %v757 = vmul.f32 1.0, %v756
    %v758 = vrcp.pop %v690
    %v759 = vmul.f32 1.0, %v758
    %v760 = vrcp.pop %v691
    %v761 = vmul.f32 1.0, %v760
    %v762 = vrcp.pop %v692
    %v763 = vmul.f32 1.0, %v762
    %v764 = vrcp.pop %v693
    %v765 = vmul.f32 1.0, %v764
    %v766 = vrcp.pop %v694
    %v767 = vmul.f32 1.0, %v766
    %v768 = vrcp.pop %v695
    %v769 = vmul.f32 1.0, %v768
    %v770 = vrcp.pop %v696
    %v771 = vmul.f32 1.0, %v770
    %v772 = vrcp.pop %v697
    %v773 = vmul.f32 1.0, %v772
    %v774 = vrcp.pop %v698
    %v775 = vmul.f32 1.0, %v774
    %v776 = vrcp.pop %v699
    %v777 = vmul.f32 1.0, %v776
    %778 = vst [vmem:[%s4] sm:$0xff] %v701
    %779 = vst [vmem:[%s4 + $0x8] sm:$0xff] %v703
    %vm780 = vcmask 261120
    %781 = vst.msk [vmem:[%s4 + $0x10] sm:$0xff] %vm780, %v705
    %782 = vst [vmem:[%s4 + $0x18] sm:$0xff] %v707
    %783 = vst [vmem:[%s4 + $0x20] sm:$0xff] %v709
    %784 = vst.msk [vmem:[%s4 + $0x28] sm:$0xff] %vm780, %v711
    %785 = vst [vmem:[%s4 + $0x30] sm:$0xff] %v713
    %786 = vst [vmem:[%s4 + $0x38] sm:$0xff] %v715
    %787 = vst.msk [vmem:[%s4 + $0x40] sm:$0xff] %vm780, %v717
    %788 = vst [vmem:[%s4 + $0x48] sm:$0xff] %v719
    %789 = vst [vmem:[%s4 + $0x50] sm:$0xff] %v721
    %790 = vst.msk [vmem:[%s4 + $0x58] sm:$0xff] %vm780, %v723
    %791 = vst [vmem:[%s4 + $0x60] sm:$0xff] %v725
    %792 = vst [vmem:[%s4 + $0x68] sm:$0xff] %v727
    %793 = vst.msk [vmem:[%s4 + $0x70] sm:$0xff] %vm780, %v729
    %794 = vst [vmem:[%s4 + $0x78] sm:$0xff] %v731
    %795 = vst [vmem:[%s4 + $0x80] sm:$0xff] %v733
    %796 = vst.msk [vmem:[%s4 + $0x88] sm:$0xff] %vm780, %v735
    %797 = vst [vmem:[%s4 + $0x90] sm:$0xff] %v737
    %798 = vst [vmem:[%s4 + $0x98] sm:$0xff] %v739
    %799 = vst.msk [vmem:[%s4 + $0xa0] sm:$0xff] %vm780, %v741
    %800 = vst [vmem:[%s4 + $0xa8] sm:$0xff] %v743
    %801 = vst [vmem:[%s4 + $0xb0] sm:$0xff] %v745
    %802 = vst.msk [vmem:[%s4 + $0xb8] sm:$0xff] %vm780, %v747
    %803 = vst [vmem:[%s4 + $0xc0] sm:$0xff] %v749
    %804 = vst [vmem:[%s4 + $0xc8] sm:$0xff] %v751
    %805 = vst.msk [vmem:[%s4 + $0xd0] sm:$0xff] %vm780, %v753
    %806 = vst [vmem:[%s4 + $0xd8] sm:$0xff] %v755
    %807 = vst [vmem:[%s4 + $0xe0] sm:$0xff] %v757
    %808 = vst.msk [vmem:[%s4 + $0xe8] sm:$0xff] %vm780, %v759
    %809 = vst [vmem:[%s4 + $0xf0] sm:$0xff] %v761
    %810 = vst [vmem:[%s4 + $0xf8] sm:$0xff] %v763
    %811 = vst.msk [vmem:[%s4 + $0x100] sm:$0xff] %vm780, %v765
    %812 = vst [vmem:[%s4 + $0x108] sm:$0xff] %v767
    %813 = vst [vmem:[%s4 + $0x110] sm:$0xff] %v769
    %814 = vst.msk [vmem:[%s4 + $0x118] sm:$0xff] %vm780, %v771
    %815 = vst [vmem:[%s4 + $0x120] sm:$0x3] %v773
    %816 = vst [vmem:[%s4 + $0x128] sm:$0x3] %v775
    %vm817 = vcmask 254976
    %818 = vst.msk [vmem:[%s4 + $0x130] sm:$0x3] %vm817, %v777
    // Predicated region
    $region22: #{tpu_custom_call.1} parent=1 // pred_check
      _
    $region23: #{tpu_custom_call.1} parent=1 // pred_check_branch
      %820 = sbr.rel (0) target = $region25
    $region24: #{tpu_custom_call.1} parent=1 // pred_region
      _
    $region25: #{tpu_custom_call.1} parent=1 // pred_fallthru
      _
    // Predicated region
    $region26: #{tpu_custom_call.1} parent=1 // pred_check
      _
    $region27: #{tpu_custom_call.1} parent=1 // pred_check_branch
      %822 = sbr.rel (0) target = $region29
    $region28: #{tpu_custom_call.1} parent=1 // pred_region
      _
    $region29: #{tpu_custom_call.1} parent=1 // pred_fallthru
      _
    %823 = vsyncpa [#allocation3], 1

</llo_original>
